<compile_context>
chip_gen: v7x
topology: tpu7x:2x2x1
jax: 0.10.0
libtpu: 0.0.40
codegen_flags: <defaults>
</compile_context>

<pallas_src>
import functools

import jax
import jax.numpy as jnp
from jax.experimental import pallas as pl
from jax.experimental.pallas import tpu as pltpu

_VMEM_LIMIT = 64 * 1024 * 1024  # fits v7x physical VMEM; plenty of headroom on v5e/v6e


def _cparams(sem):
    return pltpu.CompilerParams(dimension_semantics=sem,
                                vmem_limit_bytes=_VMEM_LIMIT)


# ----------------------------------------------------------------------------
# Kernel 1: GroupNorm statistics -> fused affine scale / shift per (batch, C)
#   grid = (B, n_s_tiles), reduction axis last ("arbitrary"), accumulators in VMEM.
# ----------------------------------------------------------------------------
def _gn_stats_kernel(x_ref, mask_ref, maskT_ref, gamma_ref, beta_ref,
                     scale_ref, shift_ref, sum_sc, sq_sc, *, eps, n_per_group):
    s = pl.program_id(1)

    @pl.when(s == 0)
    def _init():
        sum_sc[...] = jnp.zeros_like(sum_sc)
        sq_sc[...] = jnp.zeros_like(sq_sc)

    xt = x_ref[0]                                            # (Ts, C) f32
    # per-channel partial sums via XLU cross-sublane reduce (keeps MXU free)
    sum_sc[...] += jnp.sum(xt, axis=0, keepdims=True)
    sq_sc[...] += jnp.sum(xt * xt, axis=0, keepdims=True)
    # TODO(synk): single-pass E[x^2]-mean^2 can cancel for large-mean activations;
    # switch to shifted / two-pass accumulation if that regime ever matters here.

    @pl.when(s == pl.num_programs(1) - 1)
    def _finalize():
        # group-combine the tiny (1, C) vectors with mask matmuls
        s_g = jnp.dot(sum_sc[...], mask_ref[...], preferred_element_type=jnp.float32)
        ss_g = jnp.dot(sq_sc[...], mask_ref[...], preferred_element_type=jnp.float32)
        mean_g = s_g / n_per_group
        var_g = ss_g / n_per_group - mean_g * mean_g
        inv_g = jax.lax.rsqrt(var_g + eps)
        mean_c = jnp.dot(mean_g, maskT_ref[...], preferred_element_type=jnp.float32)
        inv_c = jnp.dot(inv_g, maskT_ref[...], preferred_element_type=jnp.float32)
        sc = inv_c * gamma_ref[...]                          # fused affine: x*sc + sh
        scale_ref[0] = sc
        shift_ref[0] = beta_ref[...] - mean_c * sc


# ----------------------------------------------------------------------------
# Kernel 2: fused GroupNorm-apply + packed Q|K|V projection
#   grid = (B, n_s_tiles) all parallel; ONE (Ts,C)x(C,3C) bf16 matmul, f32 accum.
#   Outputs stay channels-last (B, S, C) bf16 -> lane-dense, unmasked stores.
# ----------------------------------------------------------------------------
def _norm_qkv_kernel(x_ref, scale_ref, shift_ref, w_ref, b_ref,
                     q_ref, k_ref, v_ref):
    C = x_ref.shape[-1]
    xn = (x_ref[0] * scale_ref[0] + shift_ref[0]).astype(jnp.bfloat16)   # (Ts, C)
    qkv = jnp.dot(xn, w_ref[...], preferred_element_type=jnp.float32) + b_ref[...]
    # static slices at multiples of C (>=128) -> full-lane, unmasked stores
    q_ref[0] = qkv[:, :C].astype(jnp.bfloat16)
    k_ref[0] = qkv[:, C:2 * C].astype(jnp.bfloat16)
    v_ref[0] = qkv[:, 2 * C:].astype(jnp.bfloat16)


# ----------------------------------------------------------------------------
# Kernel 3: attention with VMEM-resident K/V + fused output projection + residual
#   grid = (B, n_q_tiles); K/V BlockSpecs have a constant index_map across the
#   q-tile axis, so the (1, S, C) K/V blocks are DMA'd once per batch and reused.
#   Online softmax runs over static in-kernel kv chunks (f32 math, bf16 matmuls).
# ----------------------------------------------------------------------------
def _attn_kernel(q_ref, k_ref, v_ref, xres_ref, wo_ref, bo_ref, o_ref, *,
                 num_heads, head_dim, kv_chunk):
    S = k_ref.shape[1]
    n_chunks = S // kv_chunk

    head_outs = []
    for h in range(num_heads):                               # static, small
        c0 = h * head_dim
        q_h = q_ref[0, :, c0:c0 + head_dim]                  # (Tq, d) bf16, pre-scaled
        m = l = acc = None
        for c in range(n_chunks):                            # static chunk loop
            r0 = c * kv_chunk
            k_c = k_ref[0, r0:r0 + kv_chunk, c0:c0 + head_dim]   # (Tkv, d) bf16
            v_c = v_ref[0, r0:r0 + kv_chunk, c0:c0 + head_dim]   # (Tkv, d) bf16
            # q_h @ k_c^T without materializing a transpose
            s = jax.lax.dot_general(q_h, k_c, (((1,), (1,)), ((), ())),
                                    preferred_element_type=jnp.float32)  # (Tq, Tkv)
            m_c = jnp.max(s, axis=-1, keepdims=True)
            if m is None:
                # first chunk initialises the running stats (no exp(-inf) edge case)
                m = m_c
                p = jnp.exp(s - m)                           # softmax math stays f32
                l = jnp.sum(p, axis=-1, keepdims=True)
                acc = jnp.dot(p.astype(jnp.bfloat16), v_c,
                              preferred_element_type=jnp.float32)        # (Tq, d)
            else:
                m_new = jnp.maximum(m, m_c)
                alpha = jnp.exp(m - m_new)
                p = jnp.exp(s - m_new)
                l = alpha * l + jnp.sum(p, axis=-1, keepdims=True)
                acc = alpha * acc + jnp.dot(p.astype(jnp.bfloat16), v_c,
                                            preferred_element_type=jnp.float32)
                m = m_new
        head_outs.append((acc * pl.reciprocal(l, approx=True)).astype(jnp.bfloat16))

    # assemble (Tq, C) once, then a single C-deep Wo matmul (fills the MXU)
    attn = head_outs[0] if num_heads == 1 else jnp.concatenate(head_outs, axis=1)
    out = jnp.dot(attn, wo_ref[...], preferred_element_type=jnp.float32)
    o_ref[0] = out + bo_ref[...] + xres_ref[0]               # +bias +residual, f32


# ----------------------------------------------------------------------------
# Wrapper
# ----------------------------------------------------------------------------
def _pick_tile(size, target):
    """Largest multiple of 8 that divides `size` and is <= target (else full)."""
    t = min(target, size)
    t -= t % 8
    while t >= 8:
        if size % t == 0:
            return t
        t -= 8
    return size


def vae_attention_block(x_nchw, params, *, num_heads, head_dim, num_groups,
                        eps=1e-5, s_tile=512, q_tile=512, kv_chunk=512):
    """JAX/Pallas equivalent of VAEAttentionBlock.forward for hidden_states."""
    B, C, H, W = x_nchw.shape
    assert C == num_heads * head_dim and C % num_groups == 0
    assert C % 128 == 0, "channel dim must be lane-dense (multiple of 128)"
    S = H * W
    Ts = _pick_tile(S, s_tile)
    Tq = _pick_tile(S, q_tile)
    Tkv = _pick_tile(S, kv_chunk)

    # Per-batch K/V residency (bf16, double-buffered by the pipeline).
    kv_resident_bytes = 2 * 2 * S * C * 2
    assert kv_resident_bytes <= 40 * 1024 * 1024, (
        "TODO(synk): add a kv-streamed flash fallback for very large spatial sizes")

    f32 = jnp.float32
    # NCHW -> (B, S, C)  (== permute(0,2,3,1).reshape in the PyTorch module)
    # TODO(synk): fold these permutes into the kernels (in-kernel transpose at the
    # stage-3 store) to save two full HBM round trips.
    x = jnp.transpose(x_nchw, (0, 2, 3, 1)).reshape(B, S, C).astype(f32)

    cg = C // num_groups
    mask = (jnp.arange(C)[:, None] // cg
            == jnp.arange(num_groups)[None, :]).astype(f32)        # (C, G)
    maskT = mask.T                                                  # (G, C)

    gamma = params["gamma"].reshape(1, C).astype(f32)
    beta = params["beta"].reshape(1, C).astype(f32)

    # fused Q|K|V weights (bf16), 1/sqrt(d) folded into the Q columns
    sm_scale = 1.0 / float(head_dim) ** 0.5
    w_qkv = jnp.concatenate(
        [params["wq"].astype(f32) * sm_scale,
         params["wk"].astype(f32),
         params["wv"].astype(f32)], axis=1).astype(jnp.bfloat16)    # (C, 3C)
    b_qkv = jnp.concatenate(
        [params["bq"].astype(f32) * sm_scale,
         params["bk"].astype(f32),
         params["bv"].astype(f32)]).reshape(1, 3 * C)               # (1, 3C) f32
    wo = params["wo"].astype(jnp.bfloat16)                          # (C, C)
    bo = params["bo"].reshape(1, C).astype(f32)

    # -------- stage 1: GroupNorm stats -> (B, 1, C) scale & shift ----------
    # TODO(synk): on v7x with B < 2 add an S-chunk parallel axis so both TCs work.
    scale_c, shift_c = pl.pallas_call(
        functools.partial(_gn_stats_kernel, eps=eps, n_per_group=float(S * cg)),
        out_shape=(jax.ShapeDtypeStruct((B, 1, C), f32),
                   jax.ShapeDtypeStruct((B, 1, C), f32)),
        grid=(B, S // Ts),
        in_specs=[
            pl.BlockSpec((1, Ts, C), lambda b, s: (b, s, 0)),
            pl.BlockSpec((C, num_groups), lambda b, s: (0, 0)),
            pl.BlockSpec((num_groups, C), lambda b, s: (0, 0)),
            pl.BlockSpec((1, C), lambda b, s: (0, 0)),
            pl.BlockSpec((1, C), lambda b, s: (0, 0)),
        ],
        out_specs=(pl.BlockSpec((1, 1, C), lambda b, s: (b, 0, 0)),
                   pl.BlockSpec((1, 1, C), lambda b, s: (b, 0, 0))),
        scratch_shapes=[pltpu.VMEM((1, C), f32), pltpu.VMEM((1, C), f32)],
        compiler_params=_cparams(("parallel", "arbitrary")),
    )(x, mask, maskT, gamma, beta)

    # -------- stage 2: fused normalize + packed QKV projection (lane-dense) -
    qkv_shape = jax.ShapeDtypeStruct((B, S, C), jnp.bfloat16)
    q, k, v = pl.pallas_call(
        _norm_qkv_kernel,
        out_shape=(qkv_shape, qkv_shape, qkv_shape),
        grid=(B, S // Ts),
        in_specs=[
            pl.BlockSpec((1, Ts, C), lambda b, s: (b, s, 0)),
            pl.BlockSpec((1, 1, C), lambda b, s: (b, 0, 0)),
            pl.BlockSpec((1, 1, C), lambda b, s: (b, 0, 0)),
            pl.BlockSpec((C, 3 * C), lambda b, s: (0, 0)),
            pl.BlockSpec((1, 3 * C), lambda b, s: (0, 0)),
        ],
        out_specs=tuple(pl.BlockSpec((1, Ts, C), lambda b, s: (b, s, 0))
                        for _ in range(3)),
        compiler_params=_cparams(("parallel", "parallel")),
    )(x, scale_c, shift_c, w_qkv, b_qkv)

    # -------- stage 3: resident-K/V attention + output projection + residual
    out = pl.pallas_call(
        functools.partial(_attn_kernel, num_heads=num_heads,
                          head_dim=head_dim, kv_chunk=Tkv),
        out_shape=jax.ShapeDtypeStruct((B, S, C), f32),
        grid=(B, S // Tq),
        in_specs=[
            pl.BlockSpec((1, Tq, C), lambda b, i: (b, i, 0)),   # q tile
            pl.BlockSpec((1, S, C), lambda b, i: (b, 0, 0)),    # K: resident per batch
            pl.BlockSpec((1, S, C), lambda b, i: (b, 0, 0)),    # V: resident per batch
            pl.BlockSpec((1, Tq, C), lambda b, i: (b, i, 0)),   # residual
            pl.BlockSpec((C, C), lambda b, i: (0, 0)),          # wo
            pl.BlockSpec((1, C), lambda b, i: (0, 0)),          # bo
        ],
        out_specs=pl.BlockSpec((1, Tq, C), lambda b, i: (b, i, 0)),
        compiler_params=_cparams(("parallel", "parallel")),
    )(q, k, v, x, wo, bo)

    # (B, S, C) -> NCHW
    return jnp.transpose(out.reshape(B, H, W, C), (0, 3, 1, 2))


# ----------------------------------------------------------------------------
# Pure-JAX reference mirroring the PyTorch forward (f32), for validation.
# ----------------------------------------------------------------------------
def _reference(x_nchw, params, *, num_heads, head_dim, num_groups, eps=1e-5):
    B, C, H, W = x_nchw.shape
    x = x_nchw.astype(jnp.float32)
    residual = x
    xg = x.reshape(B, num_groups, C // num_groups, H, W)
    mean = jnp.mean(xg, axis=(2, 3, 4), keepdims=True)
    var = jnp.var(xg, axis=(2, 3, 4), keepdims=True)
    xg = (xg - mean) / jnp.sqrt(var + eps)
    xn = xg.reshape(B, C, H, W) * params["gamma"][None, :, None, None] \
         + params["beta"][None, :, None, None]
    h = jnp.transpose(xn, (0, 2, 3, 1)).reshape(B, H * W, C)
    q = h @ params["wq"] + params["bq"]
    k = h @ params["wk"] + params["bk"]
    v = h @ params["wv"] + params["bv"]
    S = H * W
    split = lambda t: t.reshape(B, S, num_heads, head_dim).transpose(0, 2, 1, 3)
    q, k, v = split(q), split(k), split(v)
    scores = jnp.einsum("bhqd,bhkd->bhqk", q, k) / jnp.sqrt(float(head_dim))
    p = jax.nn.softmax(scores, axis=-1)
    o = jnp.einsum("bhqk,bhkd->bhqd", p, v).transpose(0, 2, 1, 3).reshape(B, S, C)
    o = o @ params["wo"] + params["bo"]
    o = jnp.transpose(o.reshape(B, H, W, C), (0, 3, 1, 2))
    return o + residual


if __name__ == "__main__":
    # Small config consistent with the module (inner_dim == in_channels,
    # norm_num_groups = 32 default).  C=128 keeps every layout lane-dense.
    B, C, H, W = 2, 128, 16, 16
    NUM_HEADS, HEAD_DIM, NUM_GROUPS, EPS = 2, 64, 32, 1e-5

    key = jax.random.PRNGKey(0)
    keys = jax.random.split(key, 12)
    params = {
        "gamma": 1.0 + 0.1 * jax.random.normal(keys[0], (C,), jnp.float32),
        "beta": 0.1 * jax.random.normal(keys[1], (C,), jnp.float32),
        "wq": 0.05 * jax.random.normal(keys[2], (C, C), jnp.float32),
        "bq": 0.05 * jax.random.normal(keys[3], (C,), jnp.float32),
        "wk": 0.05 * jax.random.normal(keys[4], (C, C), jnp.float32),
        "bk": 0.05 * jax.random.normal(keys[5], (C,), jnp.float32),
        "wv": 0.05 * jax.random.normal(keys[6], (C, C), jnp.float32),
        "bv": 0.05 * jax.random.normal(keys[7], (C,), jnp.float32),
        "wo": 0.05 * jax.random.normal(keys[8], (C, C), jnp.float32),
        "bo": 0.05 * jax.random.normal(keys[9], (C,), jnp.float32),
    }
    x = jax.random.normal(keys[10], (B, C, H, W), jnp.float32)

    # time_emb / text_emb / res_stack are untouched pass-throughs in the module.
    time_emb = jax.random.normal(keys[11], (B, 16), jnp.float32)
    text_emb = None
    res_stack = []

    # Small tiles so the multi-tile grids and the in-kernel kv-chunk loop are exercised.
    out = vae_attention_block(x, params, num_heads=NUM_HEADS, head_dim=HEAD_DIM,
                              num_groups=NUM_GROUPS, eps=EPS,
                              s_tile=64, q_tile=64, kv_chunk=64)
    out = jax.block_until_ready(out)

    ref = _reference(x, params, num_heads=NUM_HEADS, head_dim=HEAD_DIM,
                     num_groups=NUM_GROUPS, eps=EPS)
    assert out.shape == (B, C, H, W)
    err = float(jnp.max(jnp.abs(out - ref)))
    # bf16 matmuls + approx reciprocal vs. a pure-f32 reference
    assert err < 7.5e-2, f"mismatch vs pure-JAX reference: {err}"

    # module returns (hidden_states, time_emb, text_emb, res_stack)
    result = (out, time_emb, text_emb, res_stack)
    print("KERNEL_OK")
</pallas_src>

<mosaic_0001>
module attributes {stable_mosaic.version = 11 : i64} {
  func.func @_gn_stats_kernel(%arg0: i32, %arg1: i32, %arg2: memref<1x64x128xf32, #tpu.memory_space<vmem>>, %arg3: memref<128x32xf32, #tpu.memory_space<vmem>>, %arg4: memref<32x128xf32, #tpu.memory_space<vmem>>, %arg5: memref<1x128xf32, #tpu.memory_space<vmem>>, %arg6: memref<1x128xf32, #tpu.memory_space<vmem>>, %arg7: memref<1x1x128xf32, #tpu.memory_space<vmem>>, %arg8: memref<1x1x128xf32, #tpu.memory_space<vmem>>, %arg9: memref<1x128xf32, #tpu.memory_space<vmem>>, %arg10: memref<1x128xf32, #tpu.memory_space<vmem>>) attributes {dimension_semantics = [#tpu.dimension_semantics<parallel>, #tpu.dimension_semantics<arbitrary>], iteration_bounds = array<i64: 2, 4>, scalar_prefetch = 0 : i64, scratch_operands = 2 : i64, tpu.core_type = #tpu.core_type<tc>, window_params = [{transform_indices = @transform_0, window_bounds = array<i64: 1, 64, 128>}, {pipeline_mode = #tpu.pipeline_mode<synchronous>, transform_indices = @transform_1, window_bounds = array<i64: 128, 32>}, {pipeline_mode = #tpu.pipeline_mode<synchronous>, transform_indices = @transform_2, window_bounds = array<i64: 32, 128>}, {pipeline_mode = #tpu.pipeline_mode<synchronous>, transform_indices = @transform_3, window_bounds = array<i64: 1, 128>}, {pipeline_mode = #tpu.pipeline_mode<synchronous>, transform_indices = @transform_4, window_bounds = array<i64: 1, 128>}, {transform_indices = @transform_5, window_bounds = array<i64: 1, 1, 128>}, {transform_indices = @transform_6, window_bounds = array<i64: 1, 1, 128>}]} {
    %c0_i32 = arith.constant 0 : i32
    %0 = arith.cmpi eq, %arg1, %c0_i32 : i32
    %1 = arith.extui %0 : i1 to i32
    %c0_i32_0 = arith.constant 0 : i32
    %2 = arith.cmpi ne, %1, %c0_i32_0 : i32
    scf.if %2 {
      %cst_13 = arith.constant 0.000000e+00 : f32
      %19 = vector.broadcast %cst_13 : f32 to vector<1x128xf32>
      %c0_14 = arith.constant 0 : index
      %c0_15 = arith.constant 0 : index
      %20 = vector.load %arg9[%c0_14, %c0_15] : memref<1x128xf32, #tpu.memory_space<vmem>>, vector<1x128xf32>
      tpu.vector_store %arg9[%c0_14, %c0_15], %19 {strides = array<i32>} : memref<1x128xf32, #tpu.memory_space<vmem>>, vector<1x128xf32>,
      %cst_16 = arith.constant 0.000000e+00 : f32
      %21 = vector.broadcast %cst_16 : f32 to vector<1x128xf32>
      %c0_17 = arith.constant 0 : index
      %c0_18 = arith.constant 0 : index
      %22 = vector.load %arg10[%c0_17, %c0_18] : memref<1x128xf32, #tpu.memory_space<vmem>>, vector<1x128xf32>
      tpu.vector_store %arg10[%c0_17, %c0_18], %21 {strides = array<i32>} : memref<1x128xf32, #tpu.memory_space<vmem>>, vector<1x128xf32>,
    } else {
    }
    %c0 = arith.constant 0 : index
    %c0_1 = arith.constant 0 : index
    %c0_2 = arith.constant 0 : index
    %3 = vector.load %arg2[%c0, %c0_1, %c0_2] : memref<1x64x128xf32, #tpu.memory_space<vmem>>, vector<1x64x128xf32>
    %4 = vector.shape_cast %3 : vector<1x64x128xf32> to vector<64x128xf32>
    %c0_3 = arith.constant 0 : index
    %c0_4 = arith.constant 0 : index
    %5 = vector.load %arg9[%c0_3, %c0_4] : memref<1x128xf32, #tpu.memory_space<vmem>>, vector<1x128xf32>
    %cst = arith.constant dense<0.000000e+00> : vector<128xf32>
    %6 = vector.multi_reduction <add>, %4, %cst [0] : vector<64x128xf32> to vector<128xf32>
    %7 = vector.shape_cast %6 : vector<128xf32> to vector<1x128xf32>
    %8 = arith.addf %5, %7 : vector<1x128xf32>
    %c0_5 = arith.constant 0 : index
    %c0_6 = arith.constant 0 : index
    %9 = vector.load %arg9[%c0_5, %c0_6] : memref<1x128xf32, #tpu.memory_space<vmem>>, vector<1x128xf32>
    tpu.vector_store %arg9[%c0_5, %c0_6], %8 {strides = array<i32>} : memref<1x128xf32, #tpu.memory_space<vmem>>, vector<1x128xf32>,
    %c0_7 = arith.constant 0 : index
    %c0_8 = arith.constant 0 : index
    %10 = vector.load %arg10[%c0_7, %c0_8] : memref<1x128xf32, #tpu.memory_space<vmem>>, vector<1x128xf32>
    %11 = arith.mulf %4, %4 : vector<64x128xf32>
    %cst_9 = arith.constant dense<0.000000e+00> : vector<128xf32>
    %12 = vector.multi_reduction <add>, %11, %cst_9 [0] : vector<64x128xf32> to vector<128xf32>
    %13 = vector.shape_cast %12 : vector<128xf32> to vector<1x128xf32>
    %14 = arith.addf %10, %13 : vector<1x128xf32>
    %c0_10 = arith.constant 0 : index
    %c0_11 = arith.constant 0 : index
    %15 = vector.load %arg10[%c0_10, %c0_11] : memref<1x128xf32, #tpu.memory_space<vmem>>, vector<1x128xf32>
    tpu.vector_store %arg10[%c0_10, %c0_11], %14 {strides = array<i32>} : memref<1x128xf32, #tpu.memory_space<vmem>>, vector<1x128xf32>,
    %c3_i32 = arith.constant 3 : i32
    %16 = arith.cmpi eq, %arg1, %c3_i32 : i32
    %17 = arith.extui %16 : i1 to i32
    %c0_i32_12 = arith.constant 0 : i32
    %18 = arith.cmpi ne, %17, %c0_i32_12 : i32
    scf.if %18 {
      %c0_13 = arith.constant 0 : index
      %c0_14 = arith.constant 0 : index
      %19 = vector.load %arg9[%c0_13, %c0_14] : memref<1x128xf32, #tpu.memory_space<vmem>>, vector<1x128xf32>
      %c0_15 = arith.constant 0 : index
      %c0_16 = arith.constant 0 : index
      %20 = vector.load %arg3[%c0_15, %c0_16] : memref<128x32xf32, #tpu.memory_space<vmem>>, vector<128x32xf32>
      %cst_17 = arith.constant dense<0.000000e+00> : vector<1x32xf32>
      %21 = tpu.matmul %19, %20, %cst_17 {dimension_numbers = #tpu.dot_dimension_numbers<[1], [0], [0], [1], [0, 0, 1, 1], [], []>} : vector<1x128xf32>, vector<128x32xf32>, vector<1x32xf32> -> vector<1x32xf32>
      %c0_18 = arith.constant 0 : index
      %c0_19 = arith.constant 0 : index
      %22 = vector.load %arg10[%c0_18, %c0_19] : memref<1x128xf32, #tpu.memory_space<vmem>>, vector<1x128xf32>
      %c0_20 = arith.constant 0 : index
      %c0_21 = arith.constant 0 : index
      %23 = vector.load %arg3[%c0_20, %c0_21] : memref<128x32xf32, #tpu.memory_space<vmem>>, vector<128x32xf32>
      %cst_22 = arith.constant dense<0.000000e+00> : vector<1x32xf32>
      %24 = tpu.matmul %22, %23, %cst_22 {dimension_numbers = #tpu.dot_dimension_numbers<[1], [0], [0], [1], [0, 0, 1, 1], [], []>} : vector<1x128xf32>, vector<128x32xf32>, vector<1x32xf32> -> vector<1x32xf32>
      %cst_23 = arith.constant 1.024000e+03 : f32
      %25 = vector.broadcast %cst_23 : f32 to vector<1x32xf32>
      %26 = arith.divf %21, %25 : vector<1x32xf32>
      %cst_24 = arith.constant 1.024000e+03 : f32
      %27 = vector.broadcast %cst_24 : f32 to vector<1x32xf32>
      %28 = arith.divf %24, %27 : vector<1x32xf32>
      %29 = arith.mulf %26, %26 : vector<1x32xf32>
      %30 = arith.subf %28, %29 : vector<1x32xf32>
      %cst_25 = arith.constant 9.99999974E-6 : f32
      %31 = vector.broadcast %cst_25 : f32 to vector<1x32xf32>
      %32 = arith.addf %30, %31 : vector<1x32xf32>
      %33 = math.rsqrt %32 : vector<1x32xf32>
      %c0_26 = arith.constant 0 : index
      %c0_27 = arith.constant 0 : index
      %34 = vector.load %arg4[%c0_26, %c0_27] : memref<32x128xf32, #tpu.memory_space<vmem>>, vector<32x128xf32>
      %cst_28 = arith.constant dense<0.000000e+00> : vector<1x128xf32>
      %35 = tpu.matmul %26, %34, %cst_28 {dimension_numbers = #tpu.dot_dimension_numbers<[1], [0], [0], [1], [0, 0, 1, 1], [], []>} : vector<1x32xf32>, vector<32x128xf32>, vector<1x128xf32> -> vector<1x128xf32>
      %c0_29 = arith.constant 0 : index
      %c0_30 = arith.constant 0 : index
      %36 = vector.load %arg4[%c0_29, %c0_30] : memref<32x128xf32, #tpu.memory_space<vmem>>, vector<32x128xf32>
      %cst_31 = arith.constant dense<0.000000e+00> : vector<1x128xf32>
      %37 = tpu.matmul %33, %36, %cst_31 {dimension_numbers = #tpu.dot_dimension_numbers<[1], [0], [0], [1], [0, 0, 1, 1], [], []>} : vector<1x32xf32>, vector<32x128xf32>, vector<1x128xf32> -> vector<1x128xf32>
      %c0_32 = arith.constant 0 : index
      %c0_33 = arith.constant 0 : index
      %38 = vector.load %arg5[%c0_32, %c0_33] : memref<1x128xf32, #tpu.memory_space<vmem>>, vector<1x128xf32>
      %39 = arith.mulf %37, %38 : vector<1x128xf32>
      %c0_34 = arith.constant 0 : index
      %c0_35 = arith.constant 0 : index
      %c0_36 = arith.constant 0 : index
      %40 = vector.load %arg7[%c0_34, %c0_35, %c0_36] : memref<1x1x128xf32, #tpu.memory_space<vmem>>, vector<1x1x128xf32>
      %41 = vector.shape_cast %40 : vector<1x1x128xf32> to vector<1x128xf32>
      %42 = vector.shape_cast %39 : vector<1x128xf32> to vector<1x1x128xf32>
      tpu.vector_store %arg7[%c0_34, %c0_35, %c0_36], %42 {strides = array<i32>} : memref<1x1x128xf32, #tpu.memory_space<vmem>>, vector<1x1x128xf32>,
      %c0_37 = arith.constant 0 : index
      %c0_38 = arith.constant 0 : index
      %43 = vector.load %arg6[%c0_37, %c0_38] : memref<1x128xf32, #tpu.memory_space<vmem>>, vector<1x128xf32>
      %44 = arith.mulf %35, %39 : vector<1x128xf32>
      %45 = arith.subf %43, %44 : vector<1x128xf32>
      %c0_39 = arith.constant 0 : index
      %c0_40 = arith.constant 0 : index
      %c0_41 = arith.constant 0 : index
      %46 = vector.load %arg8[%c0_39, %c0_40, %c0_41] : memref<1x1x128xf32, #tpu.memory_space<vmem>>, vector<1x1x128xf32>
      %47 = vector.shape_cast %46 : vector<1x1x128xf32> to vector<1x128xf32>
      %48 = vector.shape_cast %45 : vector<1x128xf32> to vector<1x1x128xf32>
      tpu.vector_store %arg8[%c0_39, %c0_40, %c0_41], %48 {strides = array<i32>} : memref<1x1x128xf32, #tpu.memory_space<vmem>>, vector<1x1x128xf32>,
    } else {
    }
    return
  }
  func.func @transform_0(%arg0: i32, %arg1: i32) -> (i32, i32, i32) {
    %c0_i32 = arith.constant 0 : i32
    %c0_i32_0 = arith.constant 0 : i32
    return %arg0, %arg1, %c0_i32 : i32, i32, i32
  }
  func.func @transform_1(%arg0: i32, %arg1: i32) -> (i32, i32) {
    %c0_i32 = arith.constant 0 : i32
    %c0_i32_0 = arith.constant 0 : i32
    %c0_i32_1 = arith.constant 0 : i32
    return %c0_i32, %c0_i32_0 : i32, i32
  }
  func.func @transform_2(%arg0: i32, %arg1: i32) -> (i32, i32) {
    %c0_i32 = arith.constant 0 : i32
    %c0_i32_0 = arith.constant 0 : i32
    %c0_i32_1 = arith.constant 0 : i32
    return %c0_i32, %c0_i32_0 : i32, i32
  }
  func.func @transform_3(%arg0: i32, %arg1: i32) -> (i32, i32) {
    %c0_i32 = arith.constant 0 : i32
    %c0_i32_0 = arith.constant 0 : i32
    %c0_i32_1 = arith.constant 0 : i32
    return %c0_i32, %c0_i32_0 : i32, i32
  }
  func.func @transform_4(%arg0: i32, %arg1: i32) -> (i32, i32) {
    %c0_i32 = arith.constant 0 : i32
    %c0_i32_0 = arith.constant 0 : i32
    %c0_i32_1 = arith.constant 0 : i32
    return %c0_i32, %c0_i32_0 : i32, i32
  }
  func.func @transform_5(%arg0: i32, %arg1: i32) -> (i32, i32, i32) {
    %c0_i32 = arith.constant 0 : i32
    %c0_i32_0 = arith.constant 0 : i32
    %c0_i32_1 = arith.constant 0 : i32
    return %arg0, %c0_i32, %c0_i32_0 : i32, i32, i32
  }
  func.func @transform_6(%arg0: i32, %arg1: i32) -> (i32, i32, i32) {
    %c0_i32 = arith.constant 0 : i32
    %c0_i32_0 = arith.constant 0 : i32
    %c0_i32_1 = arith.constant 0 : i32
    return %arg0, %c0_i32, %c0_i32_0 : i32, i32, i32
  }
}

</mosaic_0001>

<llo_original>
// kernel: tpu_custom_call.1
$region0: #{tpu_custom_call.1}
  #allocation0 [shape = 'u32[]', space=smem, size = 0x4, offset = 0x4, fixed_abs, tag = 'smem constant byte address 0x4 - core index']
  #allocation1 [shape = 'u32[144,128]{1,0:T(1,128)}', space=vmem, size = 0x12000, scoped, tag = 'internal scratch']
  #allocation2 [shape = 'f32[1,128]{1,0:T(1,128)}', space=vmem, size = 0x200, scoped, tag = 'scratch operand']
  #allocation3 [shape = 'f32[1,128]{1,0:T(1,128)}', space=vmem, size = 0x200, scoped, tag = 'scratch operand']
  %s0 = inlined_call_operand.hbm [shape: f32[2,256,128], index: 0, kind: input, shape index: {}]
  %s1 = inlined_call_operand.hbm [shape: f32[128,32], index: 1, kind: input, shape index: {}]
  %s2 = inlined_call_operand.hbm [shape: f32[32,128], index: 2, kind: input, shape index: {}]
  %s3 = inlined_call_operand.hbm [shape: f32[1,128], index: 3, kind: input, shape index: {}]
  %s4 = inlined_call_operand.hbm [shape: f32[1,128], index: 4, kind: input, shape index: {}]
  %s5 = inlined_call_operand.hbm [shape: f32[2,1,128], index: 5, kind: output, shape index: {0}]
  %s6 = inlined_call_operand.hbm [shape: f32[2,1,128], index: 6, kind: output, shape index: {1}]
  %7 = xla_tuple %s5, %s6
  %s8 = sld [smem:[#allocation0]]
  $region89: #{tpu_custom_call.1} parent=0
    _
  %s10 = ssub.s32 1, %s8
  %s11 = scalar_select 0, %s10, %s8
  $region1: #{tpu_custom_call.1} parent=0
    #allocation4 [shape = 'u8[65536]{0}', space=vmem, size = 0x10000, scoped, tag = 'input window, operand 0']
    #allocation5 [shape = 's32[2]{0}', space=sflag, size = 0x8, scoped, tag = 'scoped memory for tpu_custom_call.1']
    #allocation6 [shape = 's32[2]{0}', space=sflag, size = 0x8, scoped, tag = 'scoped memory for tpu_custom_call.1']
    #allocation7 [shape = 'u8[65536]{0}', space=vmem, size = 0x10000, scoped, tag = 'input window, operand 1, single buffered']
    #allocation8 [shape = 's32[1]{0}', space=sflag, size = 0x4, scoped, tag = 'scoped memory for tpu_custom_call.1']
    #allocation9 [shape = 'u8[16384]{0}', space=vmem, size = 0x4000, scoped, tag = 'input window, operand 2, single buffered']
    #allocation10 [shape = 'u8[512]{0}', space=vmem, size = 0x400, scoped, tag = 'input window, operand 3, single buffered']
    #allocation11 [shape = 's32[1]{0}', space=sflag, size = 0x4, scoped, tag = 'scoped memory for tpu_custom_call.1']
    #allocation12 [shape = 'u8[512]{0}', space=vmem, size = 0x400, scoped, tag = 'input window, operand 4, single buffered']
    #allocation13 [shape = 'u8[1024]{0}', space=vmem, size = 0x400, scoped, tag = 'output window, operand 0']
    #allocation14 [shape = 'u8[1024]{0}', space=vmem, size = 0x400, scoped, tag = 'output window, operand 1']
    #allocation15 [shape = 's32[2]{0}', space=sflag, size = 0x8, scoped, tag = 'scoped memory for tpu_custom_call.1']
    %12 = vsyncpa [#allocation5], 0
    %s13 = scalar_lea.sflag [#allocation5], 1
    %14 = vsyncpa %s13, 0
    %15 = vsyncpa [#allocation8], 0
    %16 = vsyncpa [#allocation11], 0
    %17 = vsyncpa [#allocation6], 0
    %s18 = scalar_lea.sflag [#allocation6], 1
    %19 = vsyncpa %s18, 0
    %20 = vsyncpa [#allocation15], 0
    %s21 = scalar_lea.sflag [#allocation15], 1
    %22 = vsyncpa %s21, 0
    loop: start=0, step=1, limit=10
    $region2: #{tpu_custom_call.1} parent=1 // loop_pre_header
      _
    $region3: #{tpu_custom_call.1} parent=1 // loop_header
      %s24 = sphi 0, %s28
      %p25 = scmp.ge.s32.totalorder %s24, 10
      %s31 = sphi 0, %s43
      %s32 = sphi 0, %s39
      %s33 = sphi 0, %s31
      %s34 = sphi 0, %s32
      %s35 = sphi 0, %s33
      %s36 = sphi 0, %s34
      %s48 = sphi 0, %s50
      %s51 = sphi 0, %s48
      %s52 = sphi 0, %s51
      %s68 = sphi 0, %s52
      %s72 = sphi 0, %s72
      %s74 = sphi 0, %s72
      %s75 = sphi 0, %s74
      %s89 = sphi 0, %s75
      %s93 = sphi 0, %s93
      %s95 = sphi 0, %s93
      %s96 = sphi 0, %s95
      %s110 = sphi 0, %s96
      %s114 = sphi 0, %s114
      %s116 = sphi 0, %s114
      %s117 = sphi 0, %s116
      %s131 = sphi 0, %s117
      %s135 = sphi 0, %s135
      %s137 = sphi 0, %s135
      %s138 = sphi 0, %s137
      %s152 = sphi 0, %s138
      %s158 = sphi 0, %s160
      %s161 = sphi 0, %s158
      %s162 = sphi 0, %s161
      %s178 = sphi 0, %s162
      %s184 = sphi 0, %s186
      %s187 = sphi 0, %s184
      %s188 = sphi 0, %s187
      %s204 = sphi 0, %s188
    $region4: #{tpu_custom_call.1} parent=1 // loop_header_branch
      %27 = sbr.rel (%p25) target = $region8
    $region5: #{tpu_custom_call.1} parent=1 // loop_body
      %s29 = ssub.s32 %s24, 1
      %s30 = ssub.s32 %s24, 2
      %s37 = sadd.s32 1, %s32
      %p38 = scmp.ge.s32.totalorder %s37, 4
      %s39 = scalar_select %p38, 0, %s37
      %s40 = sadd.s32 1, %s31
      %s41 = scalar_select %p38, %s40, %s31
      %p42 = scmp.ge.s32.totalorder %s41, 2
      %s43 = scalar_select %p42, 0, %s41
      %s44 = ssub.s32 %s31, %s43
      %s45 = ssub.s32 %s32, %s39
      %s46 = sor.u32 %s44, %s45
      %p47 = scmp.eq.s32.totalorder %s46, 0
      %s49 = sadd.s32 %s48, 1
      %s50 = scalar_select %p47, %s48, %s49
      %p53 = pneg %p47
      %p54 = scmp.eq.s32.totalorder %s24, 7
      %p55 = por %p53, %p54
      %p56 = scmp.ne.s32.totalorder %s48, %s51
      %p57 = scmp.eq.s32.totalorder %s24, 0
      %p58 = por %p56, %p57
      %p59 = scmp.ne.s32.totalorder %s48, %s51
      %p60 = scmp.eq.s32.totalorder %s29, 7
      %p61 = por %p59, %p60
      %p62 = scmp.ne.s32.totalorder %s51, %s52
      %p63 = scmp.eq.s32.totalorder %s29, 0
      %p64 = por %p62, %p63
      %p65 = scmp.ne.s32.totalorder %s51, %s52
      %p66 = scmp.eq.s32.totalorder %s30, 7
      %p67 = por %p65, %p66
      %p69 = scmp.ne.s32.totalorder %s52, %s68
      %p70 = scmp.eq.s32.totalorder %s30, 0
      %p71 = por %p69, %p70
      %s73 = sadd.s32 %s72, 1
      %p76 = scmp.eq.s32.totalorder %s24, 7
      %p77 = scmp.ne.s32.totalorder %s72, %s74
      %p78 = scmp.eq.s32.totalorder %s24, 0
      %p79 = por %p77, %p78
      %p80 = scmp.ne.s32.totalorder %s72, %s74
      %p81 = scmp.eq.s32.totalorder %s29, 7
      %p82 = por %p80, %p81
      %p83 = scmp.ne.s32.totalorder %s74, %s75
      %p84 = scmp.eq.s32.totalorder %s29, 0
      %p85 = por %p83, %p84
      %p86 = scmp.ne.s32.totalorder %s74, %s75
      %p87 = scmp.eq.s32.totalorder %s30, 7
      %p88 = por %p86, %p87
      %p90 = scmp.ne.s32.totalorder %s75, %s89
      %p91 = scmp.eq.s32.totalorder %s30, 0
      %p92 = por %p90, %p91
      %s94 = sadd.s32 %s93, 1
      %p97 = scmp.eq.s32.totalorder %s24, 7
      %p98 = scmp.ne.s32.totalorder %s93, %s95
      %p99 = scmp.eq.s32.totalorder %s24, 0
      %p100 = por %p98, %p99
      %p101 = scmp.ne.s32.totalorder %s93, %s95
      %p102 = scmp.eq.s32.totalorder %s29, 7
      %p103 = por %p101, %p102
      %p104 = scmp.ne.s32.totalorder %s95, %s96
      %p105 = scmp.eq.s32.totalorder %s29, 0
      %p106 = por %p104, %p105
      %p107 = scmp.ne.s32.totalorder %s95, %s96
      %p108 = scmp.eq.s32.totalorder %s30, 7
      %p109 = por %p107, %p108
      %p111 = scmp.ne.s32.totalorder %s96, %s110
      %p112 = scmp.eq.s32.totalorder %s30, 0
      %p113 = por %p111, %p112
      %s115 = sadd.s32 %s114, 1
      %p118 = scmp.eq.s32.totalorder %s24, 7
      %p119 = scmp.ne.s32.totalorder %s114, %s116
      %p120 = scmp.eq.s32.totalorder %s24, 0
      %p121 = por %p119, %p120
      %p122 = scmp.ne.s32.totalorder %s114, %s116
      %p123 = scmp.eq.s32.totalorder %s29, 7
      %p124 = por %p122, %p123
      %p125 = scmp.ne.s32.totalorder %s116, %s117
      %p126 = scmp.eq.s32.totalorder %s29, 0
      %p127 = por %p125, %p126
      %p128 = scmp.ne.s32.totalorder %s116, %s117
      %p129 = scmp.eq.s32.totalorder %s30, 7
      %p130 = por %p128, %p129
      %p132 = scmp.ne.s32.totalorder %s117, %s131
      %p133 = scmp.eq.s32.totalorder %s30, 0
      %p134 = por %p132, %p133
      %s136 = sadd.s32 %s135, 1
      %p139 = scmp.eq.s32.totalorder %s24, 7
      %p140 = scmp.ne.s32.totalorder %s135, %s137
      %p141 = scmp.eq.s32.totalorder %s24, 0
      %p142 = por %p140, %p141
      %p143 = scmp.ne.s32.totalorder %s135, %s137
      %p144 = scmp.eq.s32.totalorder %s29, 7
      %p145 = por %p143, %p144
      %p146 = scmp.ne.s32.totalorder %s137, %s138
      %p147 = scmp.eq.s32.totalorder %s29, 0
      %p148 = por %p146, %p147
      %p149 = scmp.ne.s32.totalorder %s137, %s138
      %p150 = scmp.eq.s32.totalorder %s30, 7
      %p151 = por %p149, %p150
      %p153 = scmp.ne.s32.totalorder %s138, %s152
      %p154 = scmp.eq.s32.totalorder %s30, 0
      %p155 = por %p153, %p154
      %s156 = ssub.s32 %s31, %s43
      %p157 = scmp.eq.s32.totalorder %s156, 0
      %s159 = sadd.s32 %s158, 1
      %s160 = scalar_select %p157, %s158, %s159
      %p163 = pneg %p157
      %p164 = scmp.eq.s32.totalorder %s24, 7
      %p165 = por %p163, %p164
      %p166 = scmp.ne.s32.totalorder %s158, %s161
      %p167 = scmp.eq.s32.totalorder %s24, 0
      %p168 = por %p166, %p167
      %p169 = scmp.ne.s32.totalorder %s158, %s161
      %p170 = scmp.eq.s32.totalorder %s29, 7
      %p171 = por %p169, %p170
      %p172 = scmp.ne.s32.totalorder %s161, %s162
      %p173 = scmp.eq.s32.totalorder %s29, 0
      %p174 = por %p172, %p173
      %p175 = scmp.ne.s32.totalorder %s161, %s162
      %p176 = scmp.eq.s32.totalorder %s30, 7
      %p177 = por %p175, %p176
      %p179 = scmp.ne.s32.totalorder %s162, %s178
      %p180 = scmp.eq.s32.totalorder %s30, 0
      %p181 = por %p179, %p180
      %s182 = ssub.s32 %s31, %s43
      %p183 = scmp.eq.s32.totalorder %s182, 0
      %s185 = sadd.s32 %s184, 1
      %s186 = scalar_select %p183, %s184, %s185
      %p189 = pneg %p183
      %p190 = scmp.eq.s32.totalorder %s24, 7
      %p191 = por %p189, %p190
      %p192 = scmp.ne.s32.totalorder %s184, %s187
      %p193 = scmp.eq.s32.totalorder %s24, 0
      %p194 = por %p192, %p193
      %p195 = scmp.ne.s32.totalorder %s184, %s187
      %p196 = scmp.eq.s32.totalorder %s29, 7
      %p197 = por %p195, %p196
      %p198 = scmp.ne.s32.totalorder %s187, %s188
      %p199 = scmp.eq.s32.totalorder %s29, 0
      %p200 = por %p198, %p199
      %p201 = scmp.ne.s32.totalorder %s187, %s188
      %p202 = scmp.eq.s32.totalorder %s30, 7
      %p203 = por %p201, %p202
      %p205 = scmp.ne.s32.totalorder %s188, %s204
      %p206 = scmp.eq.s32.totalorder %s30, 0
      %p207 = por %p205, %p206
      %p208 = scmp.le.s32.totalorder 1, %s24
      %p209 = scmp.lt.s32.totalorder %s24, 9
      %p210 = pnand %p208, %p209
      %p211 = pneg %p210
      // Predicated region
      $region9: #{tpu_custom_call.1} parent=5 // pred_check
        _
      $region10: #{tpu_custom_call.1} parent=5 // pred_check_branch
        %213 = sbr.rel (%p210) target = $region12
      $region11: #{tpu_custom_call.1} parent=5 // pred_region
        %s214 = ssub.s32 %s24, 1
        // Predicated region
        $region13: #{tpu_custom_call.1} parent=11 // pred_check
          %p215 = pneg %p85
        $region14: #{tpu_custom_call.1} parent=11 // pred_check_branch
          %217 = sbr.rel (%p215) target = $region16
        $region15: #{tpu_custom_call.1} parent=11 // pred_region
          %s219 = ssub.s32 2048, 2048
          %220 = vsyncadd [#allocation8], %s219
          %s221 = sshll.u32 [#allocation7], 4
          %s222 = int_to_ptr.vmem [resolvable:$true] %s221
          %227 = dma.hbm_to_vmem [thread:$0]  %s1, 2048, %s222, [#allocation8], 128, 128, 8
        $region16: #{tpu_custom_call.1} parent=11 // pred_fallthru
          _
        // Predicated region
        $region17: #{tpu_custom_call.1} parent=11 // pred_check
          %p228 = pneg %p106
        $region18: #{tpu_custom_call.1} parent=11 // pred_check_branch
          %230 = sbr.rel (%p228) target = $region20
        $region19: #{tpu_custom_call.1} parent=11 // pred_region
          %s232 = ssub.s32 512, 512
          %233 = vsyncadd [#allocation8], %s232
          %s234 = sshll.u32 [#allocation9], 4
          %s235 = int_to_ptr.vmem [resolvable:$true] %s234
          %240 = dma.hbm_to_vmem [thread:$0]  %s2, 512, %s235, [#allocation8], 128, 128, 8
        $region20: #{tpu_custom_call.1} parent=11 // pred_fallthru
          _
        // Predicated region
        $region21: #{tpu_custom_call.1} parent=11 // pred_check
          %p241 = pneg %p127
        $region22: #{tpu_custom_call.1} parent=11 // pred_check_branch
          %243 = sbr.rel (%p241) target = $region24
        $region23: #{tpu_custom_call.1} parent=11 // pred_region
          %s245 = ssub.s32 16, 16
          %246 = vsyncadd [#allocation11], %s245
          %s248 = sshll.u32 [#allocation10], 4
          %s249 = int_to_ptr.vmem [resolvable:$true] %s248
          %251 = dma.hbm_to_vmem [thread:$0]  %s3, 16, %s249, [#allocation11]
        $region24: #{tpu_custom_call.1} parent=11 // pred_fallthru
          _
        // Predicated region
        $region25: #{tpu_custom_call.1} parent=11 // pred_check
          %p252 = pneg %p148
        $region26: #{tpu_custom_call.1} parent=11 // pred_check_branch
          %254 = sbr.rel (%p252) target = $region28
        $region27: #{tpu_custom_call.1} parent=11 // pred_region
          %s256 = ssub.s32 16, 16
          %257 = vsyncadd [#allocation11], %s256
          %s259 = sshll.u32 [#allocation12], 4
          %s260 = int_to_ptr.vmem [resolvable:$true] %s259
          %262 = dma.hbm_to_vmem [thread:$0]  %s4, 16, %s260, [#allocation11]
        $region28: #{tpu_custom_call.1} parent=11 // pred_fallthru
          _
      $region12: #{tpu_custom_call.1} parent=5 // pred_fallthru
        _
      %p263 = scmp.lt.s32.totalorder %s24, 8
      // Predicated region
      $region29: #{tpu_custom_call.1} parent=5 // pred_check
        %p264 = pneg %p263
      $region30: #{tpu_custom_call.1} parent=5 // pred_check_branch
        %266 = sbr.rel (%p264) target = $region32
      $region31: #{tpu_custom_call.1} parent=5 // pred_region
        // Predicated region
        $region33: #{tpu_custom_call.1} parent=31 // pred_check
          %p267 = pneg %p58
        $region34: #{tpu_custom_call.1} parent=31 // pred_check_branch
          %269 = sbr.rel (%p267) target = $region36
        $region35: #{tpu_custom_call.1} parent=31 // pred_region
          %s270 = sand.u32 %s48, 1
          %s271 = scalar_lea.sflag [#allocation5], %s270
          %s272 = sand.u32 %s48, 1
          %s273 = smul.addr %s272, 64
          %s274 = scalar_lea.vmem [#allocation4], %s273
          %s275 = smul.u32 8, %s32
          %s277 = ssub.s32 1024, 1024
          %278 = vsyncadd %s271, %s277
          %s279 = smul.addr %s31, 32
          %s280 = sadd.s32 %s275, %s279
          %s281 = smul.addr %s280, 128
          %s282 = scalar_lea.hbm %s0, %s281
          %s283 = sshll.u32 %s274, 4
          %s284 = int_to_ptr.vmem [resolvable:$true] %s283
          %289 = dma.hbm_to_vmem [thread:$0]  %s282, 1024, %s284, %s271, 128, 128, 8
        $region36: #{tpu_custom_call.1} parent=31 // pred_fallthru
          _
      $region32: #{tpu_custom_call.1} parent=5 // pred_fallthru
        _
      %p290 = scmp.le.s32.totalorder 1, %s24
      %p291 = scmp.lt.s32.totalorder %s24, 9
      %p292 = pnand %p290, %p291
      %p293 = pneg %p292
      // Predicated region
      $region37: #{tpu_custom_call.1} parent=5 // pred_check
        _
      $region38: #{tpu_custom_call.1} parent=5 // pred_check_branch
        %295 = sbr.rel (%p292) target = $region40
      $region39: #{tpu_custom_call.1} parent=5 // pred_region
        %s296 = ssub.s32 %s24, 1
        %s297 = sand.u32 %s51, 1
        %s298 = scalar_lea.sflag [#allocation5], %s297
        %s299 = sand.u32 %s51, 1
        %s300 = smul.addr %s299, 64
        %s301 = scalar_lea.vmem [#allocation4], %s300
        // Predicated region
        $region41: #{tpu_custom_call.1} parent=39 // pred_check
          %p302 = pneg %p64
        $region42: #{tpu_custom_call.1} parent=39 // pred_check_branch
          %304 = sbr.rel (%p302) target = $region44
        $region43: #{tpu_custom_call.1} parent=39 // pred_region
          %305 = dma.done %s298, 1024
        $region44: #{tpu_custom_call.1} parent=39 // pred_fallthru
          _
        // Predicated region
        $region45: #{tpu_custom_call.1} parent=39 // pred_check
          %p306 = pneg %p85
        $region46: #{tpu_custom_call.1} parent=39 // pred_check_branch
          %308 = sbr.rel (%p306) target = $region48
        $region47: #{tpu_custom_call.1} parent=39 // pred_region
          %309 = dma.done [#allocation8], 2048
        $region48: #{tpu_custom_call.1} parent=39 // pred_fallthru
          _
        // Predicated region
        $region49: #{tpu_custom_call.1} parent=39 // pred_check
          %p310 = pneg %p106
        $region50: #{tpu_custom_call.1} parent=39 // pred_check_branch
          %312 = sbr.rel (%p310) target = $region52
        $region51: #{tpu_custom_call.1} parent=39 // pred_region
          %313 = dma.done [#allocation8], 512
        $region52: #{tpu_custom_call.1} parent=39 // pred_fallthru
          _
        // Predicated region
        $region53: #{tpu_custom_call.1} parent=39 // pred_check
          %p314 = pneg %p127
        $region54: #{tpu_custom_call.1} parent=39 // pred_check_branch
          %316 = sbr.rel (%p314) target = $region56
        $region55: #{tpu_custom_call.1} parent=39 // pred_region
          %317 = dma.done [#allocation11], 16
        $region56: #{tpu_custom_call.1} parent=39 // pred_fallthru
          _
        // Predicated region
        $region57: #{tpu_custom_call.1} parent=39 // pred_check
          %p318 = pneg %p148
        $region58: #{tpu_custom_call.1} parent=39 // pred_check_branch
          %320 = sbr.rel (%p318) target = $region60
        $region59: #{tpu_custom_call.1} parent=39 // pred_region
          %321 = dma.done [#allocation11], 16
        $region60: #{tpu_custom_call.1} parent=39 // pred_fallthru
          _
        %s322 = sand.u32 %s51, 1
        %s323 = scalar_lea.sflag [#allocation5], %s322
        %s324 = sand.u32 %s51, 1
        %s325 = smul.addr %s324, 64
        %s326 = scalar_lea.vmem [#allocation4], %s325
        %p327 = pneg %p64
        %p328 = pneg %p61
        %p329 = pneg %p85
        %p330 = pneg %p82
        %p331 = pneg %p106
        %p332 = pneg %p103
        %p333 = pneg %p127
        %p334 = pneg %p124
        %p335 = pneg %p148
        %p336 = pneg %p145
        %p337 = pneg %p174
        %p338 = pneg %p171
        %s339 = sand.u32 %s161, 1
        %s340 = scalar_lea.sflag [#allocation6], %s339
        %s341 = sand.u32 %s161, 1
        %s342 = scalar_lea.vmem [#allocation13], %s341
        %p343 = pneg %p200
        %p344 = pneg %p197
        %s345 = sand.u32 %s187, 1
        %s346 = scalar_lea.sflag [#allocation15], %s345
        %s347 = sand.u32 %s187, 1
        %s348 = scalar_lea.vmem [#allocation14], %s347
        %s349 = smul.u32 8, %s34
        %p350 = scmp.eq.s32.totalorder %s34, 0
        // Predicated region
        $region61: #{tpu_custom_call.1} parent=39 // pred_check
          %p351 = pneg %p350
        $region62: #{tpu_custom_call.1} parent=39 // pred_check_branch
          %353 = sbr.rel (%p351) target = $region64
        $region63: #{tpu_custom_call.1} parent=39 // pred_region
          %354 = vst [vmem:[#allocation2] sm:$0x1] 0.0
          %355 = vst [vmem:[#allocation3] sm:$0x1] 0.0
        $region64: #{tpu_custom_call.1} parent=39 // pred_fallthru
          _
        %v356 = vld [vmem:[%s301] sm:$0xff]
        %v357 = vld [vmem:[%s301 + $0x8] sm:$0xff]
        %v358 = vld [vmem:[%s301 + $0x10] sm:$0xff]
        %v359 = vld [vmem:[%s301 + $0x18] sm:$0xff]
        %v360 = vld [vmem:[%s301 + $0x20] sm:$0xff]
        %v361 = vld [vmem:[%s301 + $0x28] sm:$0xff]
        %v362 = vld [vmem:[%s301 + $0x30] sm:$0xff]
        %v363 = vld [vmem:[%s301 + $0x38] sm:$0xff]
        %v364 = vld [vmem:[#allocation2] sm:$0x1]
        %v365 = vadd.f32 %v356, %v357
        %v366 = vadd.f32 %v365, %v358
        %v367 = vadd.f32 %v366, %v359
        %v368 = vadd.f32 %v367, %v360
        %v369 = vadd.f32 %v368, %v361
        %v370 = vadd.f32 %v369, %v362
        %v371 = vadd.f32 %v370, %v363
        %v372 = vrot.slane %v371, 4
        %v373 = vadd.f32 %v371, %v372
        %v374 = vrot.slane %v373, 2
        %v375 = vadd.f32 %v373, %v374
        %v376 = vrot.slane %v375, 1
        %v377 = vadd.f32 %v375, %v376
        %v378 = vadd.f32 %v364, %v377
        %379 = vst [vmem:[#allocation2] sm:$0x1] %v378
        %v380 = vld [vmem:[#allocation3] sm:$0x1]
        %v381 = vmul.f32 %v356, %v356
        %v382 = vmul.f32 %v357, %v357
        %v383 = vmul.f32 %v358, %v358
        %v384 = vmul.f32 %v359, %v359
        %v385 = vmul.f32 %v360, %v360
        %v386 = vmul.f32 %v361, %v361
        %v387 = vmul.f32 %v362, %v362
        %v388 = vmul.f32 %v363, %v363
        %v389 = vadd.f32 %v381, %v382
        %v390 = vadd.f32 %v389, %v383
        %v391 = vadd.f32 %v390, %v384
        %v392 = vadd.f32 %v391, %v385
        %v393 = vadd.f32 %v392, %v386
        %v394 = vadd.f32 %v393, %v387
        %v395 = vadd.f32 %v394, %v388
        %v396 = vrot.slane %v395, 4
        %v397 = vadd.f32 %v395, %v396
        %v398 = vrot.slane %v397, 2
        %v399 = vadd.f32 %v397, %v398
        %v400 = vrot.slane %v399, 1
        %v401 = vadd.f32 %v399, %v400
        %v402 = vadd.f32 %v380, %v401
        %403 = vst [vmem:[#allocation3] sm:$0x1] %v402
        %p404 = scmp.eq.s32.totalorder %s34, 3
        // Predicated region
        $region65: #{tpu_custom_call.1} parent=39 // pred_check
          %p405 = pneg %p404
        $region66: #{tpu_custom_call.1} parent=39 // pred_check_branch
          %407 = sbr.rel (%p405) target = $region68
        $region67: #{tpu_custom_call.1} parent=39 // pred_region
          %v408 = vld [vmem:[#allocation2] sm:$0x1]
          %v409 = vld [vmem:[#allocation7] sm:$0xff]
          %v410 = vld [vmem:[#allocation7 + $0x8] sm:$0xff]
          %v411 = vld [vmem:[#allocation7 + $0x10] sm:$0xff]
          %v412 = vld [vmem:[#allocation7 + $0x18] sm:$0xff]
          %v413 = vld [vmem:[#allocation7 + $0x20] sm:$0xff]
          %v414 = vld [vmem:[#allocation7 + $0x28] sm:$0xff]
          %v415 = vld [vmem:[#allocation7 + $0x30] sm:$0xff]
          %v416 = vld [vmem:[#allocation7 + $0x38] sm:$0xff]
          %v417 = vld [vmem:[#allocation7 + $0x40] sm:$0xff]
          %v418 = vld [vmem:[#allocation7 + $0x48] sm:$0xff]
          %v419 = vld [vmem:[#allocation7 + $0x50] sm:$0xff]
          %v420 = vld [vmem:[#allocation7 + $0x58] sm:$0xff]
          %v421 = vld [vmem:[#allocation7 + $0x60] sm:$0xff]
          %v422 = vld [vmem:[#allocation7 + $0x68] sm:$0xff]
          %v423 = vld [vmem:[#allocation7 + $0x70] sm:$0xff]
          %v424 = vld [vmem:[#allocation7 + $0x78] sm:$0xff]
          %425 = vmatprep.subr.mxu0 0.0
          %426 = vmatpush1.msra.mxu0 %v409
          %427 = vmatprep.subr.mxu0 0.0
          %428 = vmatpush1.msra.mxu0 %v410
          %429 = vmatprep.subr.mxu0 0.0
          %430 = vmatpush1.msra.mxu0 %v411
          %431 = vmatprep.subr.mxu0 0.0
          %432 = vmatpush1.msra.mxu0 %v412
          %433 = vmatprep.subr.mxu0 0.0
          %434 = vmatpush1.msra.mxu0 %v413
          %435 = vmatprep.subr.mxu0 0.0
          %436 = vmatpush1.msra.mxu0 %v414
          %437 = vmatprep.subr.mxu0 0.0
          %438 = vmatpush1.msra.mxu0 %v415
          %439 = vmatprep.subr.mxu0 0.0
          %440 = vmatpush1.msra.mxu0 %v416
          %441 = vmatprep.subr.mxu0 0.0
          %442 = vmatpush1.msra.mxu0 %v417
          %443 = vmatprep.subr.mxu0 0.0
          %444 = vmatpush1.msra.mxu0 %v418
          %445 = vmatprep.subr.mxu0 0.0
          %446 = vmatpush1.msra.mxu0 %v419
          %447 = vmatprep.subr.mxu0 0.0
          %448 = vmatpush1.msra.mxu0 %v420
          %449 = vmatprep.subr.mxu0 0.0
          %450 = vmatpush1.msra.mxu0 %v421
          %451 = vmatprep.subr.mxu0 0.0
          %452 = vmatpush1.msra.mxu0 %v422
          %453 = vmatprep.subr.mxu0 0.0
          %454 = vmatpush1.msra.mxu0 %v423
          %455 = vmatprep.subr.mxu0 0.0
          %456 = vmatpush1.msra.mxu0 %v424
          %457 = vmatprep.subr.mxu0 0.0
          %458 = vmatpush1.msra.mxu0 0.0
          %459 = vmatprep.subr.mxu0 0.0
          %460 = vmatpush1.msra.mxu0 0.0
          %461 = vmatprep.subr.mxu0 0.0
          %462 = vmatpush1.msra.mxu0 0.0
          %463 = vmatprep.subr.mxu0 0.0
          %464 = vmatpush1.msra.mxu0 0.0
          %465 = vmatprep.subr.mxu0 0.0
          %466 = vmatpush1.msra.mxu0 0.0
          %467 = vmatprep.subr.mxu0 0.0
          %468 = vmatpush1.msra.mxu0 0.0
          %469 = vmatprep.subr.mxu0 0.0
          %470 = vmatpush1.msra.mxu0 0.0
          %471 = vmatprep.subr.mxu0 0.0
          %472 = vmatpush1.msra.mxu0 0.0
          %473 = vmatprep.subr.mxu0 0.0
          %474 = vmatpush1.msra.mxu0 0.0
          %475 = vmatprep.subr.mxu0 0.0
          %476 = vmatpush1.msra.mxu0 0.0
          %477 = vmatprep.subr.mxu0 0.0
          %478 = vmatpush1.msra.mxu0 0.0
          %479 = vmatprep.subr.mxu0 0.0
          %480 = vmatpush1.msra.mxu0 0.0
          %481 = vmatprep.subr.mxu0 0.0
          %482 = vmatpush1.msra.mxu0 0.0
          %483 = vmatprep.subr.mxu0 0.0
          %484 = vmatpush1.msra.mxu0 0.0
          %485 = vmatprep.subr.mxu0 0.0
          %486 = vmatpush1.msra.mxu0 0.0
          %487 = vmatprep.subr.mxu0 0.0
          %488 = vmatpush1.msra.mxu0 0.0
          %489 = vmatprep.mubr.f32.mxu0 0.0
          %490 = vmatmul.mubr.f32.gmra.mrb[0].mxu0 %v408
          %v491 = vpop.f32.mrb[0].mxu0
          %v492 = vadd.f32 0.0, %v491
          %v493 = vpop.f32.mrb[0].mxu0
          %494 = vdwg.mxu0
          %v495 = vld [vmem:[#allocation3] sm:$0x1]
          %496 = vmatprep.subr.mxu0 0.0
          %497 = vmatpush1.msra.mxu0 %v409
          %498 = vmatprep.subr.mxu0 0.0
          %499 = vmatpush1.msra.mxu0 %v410
          %500 = vmatprep.subr.mxu0 0.0
          %501 = vmatpush1.msra.mxu0 %v411
          %502 = vmatprep.subr.mxu0 0.0
          %503 = vmatpush1.msra.mxu0 %v412
          %504 = vmatprep.subr.mxu0 0.0
          %505 = vmatpush1.msra.mxu0 %v413
          %506 = vmatprep.subr.mxu0 0.0
          %507 = vmatpush1.msra.mxu0 %v414
          %508 = vmatprep.subr.mxu0 0.0
          %509 = vmatpush1.msra.mxu0 %v415
          %510 = vmatprep.subr.mxu0 0.0
          %511 = vmatpush1.msra.mxu0 %v416
          %512 = vmatprep.subr.mxu0 0.0
          %513 = vmatpush1.msra.mxu0 %v417
          %514 = vmatprep.subr.mxu0 0.0
          %515 = vmatpush1.msra.mxu0 %v418
          %516 = vmatprep.subr.mxu0 0.0
          %517 = vmatpush1.msra.mxu0 %v419
          %518 = vmatprep.subr.mxu0 0.0
          %519 = vmatpush1.msra.mxu0 %v420
          %520 = vmatprep.subr.mxu0 0.0
          %521 = vmatpush1.msra.mxu0 %v421
          %522 = vmatprep.subr.mxu0 0.0
          %523 = vmatpush1.msra.mxu0 %v422
          %524 = vmatprep.subr.mxu0 0.0
          %525 = vmatpush1.msra.mxu0 %v423
          %526 = vmatprep.subr.mxu0 0.0
          %527 = vmatpush1.msra.mxu0 %v424
          %528 = vmatprep.subr.mxu0 0.0
          %529 = vmatpush1.msra.mxu0 0.0
          %530 = vmatprep.subr.mxu0 0.0
          %531 = vmatpush1.msra.mxu0 0.0
          %532 = vmatprep.subr.mxu0 0.0
          %533 = vmatpush1.msra.mxu0 0.0
          %534 = vmatprep.subr.mxu0 0.0
          %535 = vmatpush1.msra.mxu0 0.0
          %536 = vmatprep.subr.mxu0 0.0
          %537 = vmatpush1.msra.mxu0 0.0
          %538 = vmatprep.subr.mxu0 0.0
          %539 = vmatpush1.msra.mxu0 0.0
          %540 = vmatprep.subr.mxu0 0.0
          %541 = vmatpush1.msra.mxu0 0.0
          %542 = vmatprep.subr.mxu0 0.0
          %543 = vmatpush1.msra.mxu0 0.0
          %544 = vmatprep.subr.mxu0 0.0
          %545 = vmatpush1.msra.mxu0 0.0
          %546 = vmatprep.subr.mxu0 0.0
          %547 = vmatpush1.msra.mxu0 0.0
          %548 = vmatprep.subr.mxu0 0.0
          %549 = vmatpush1.msra.mxu0 0.0
          %550 = vmatprep.subr.mxu0 0.0
          %551 = vmatpush1.msra.mxu0 0.0
          %552 = vmatprep.subr.mxu0 0.0
          %553 = vmatpush1.msra.mxu0 0.0
          %554 = vmatprep.subr.mxu0 0.0
          %555 = vmatpush1.msra.mxu0 0.0
          %556 = vmatprep.subr.mxu0 0.0
          %557 = vmatpush1.msra.mxu0 0.0
          %558 = vmatprep.subr.mxu0 0.0
          %559 = vmatpush1.msra.mxu0 0.0
          %560 = vmatprep.mubr.f32.mxu0 0.0
          %561 = vmatmul.mubr.f32.gmra.mrb[0].mxu0 %v495
          %v562 = vpop.f32.mrb[0].mxu0
          %v563 = vadd.f32 0.0, %v562
          %v564 = vpop.f32.mrb[0].mxu0
          %565 = vdwg.mxu0
          %v566 = vrcp.pop 1024.0
          %v567 = vmul.f32 %v492, %v566
          %v568 = vmul.f32 %v563, %v566
          %v569 = vmul.f32 %v567, %v567
          %v570 = vsub.f32 %v568, %v569
          %v571 = vadd.f32 %v570, 1e-05
          %v572 = vrsqrt.pop %v571
          %v573 = vld [vmem:[#allocation9] sm:$0xff]
          %v574 = vld [vmem:[#allocation9 + $0x8] sm:$0xff]
          %v575 = vld [vmem:[#allocation9 + $0x10] sm:$0xff]
          %v576 = vld [vmem:[#allocation9 + $0x18] sm:$0xff]
          %vm577 = vcmask 261120
          %v579 = vsel %vm577, %v567, 0
          %581 = vmatprep.subr.mxu0 0.0
          %582 = vmatpush1.msra.mxu0 %v573
          %583 = vmatprep.subr.mxu0 0.0
          %584 = vmatpush1.msra.mxu0 %v574
          %585 = vmatprep.subr.mxu0 0.0
          %586 = vmatpush1.msra.mxu0 %v575
          %587 = vmatprep.subr.mxu0 0.0
          %588 = vmatpush1.msra.mxu0 %v576
          %589 = vmatprep.subr.mxu0 0.0
          %590 = vmatpush1.msra.mxu0 0.0
          %591 = vmatprep.subr.mxu0 0.0
          %592 = vmatpush1.msra.mxu0 0.0
          %593 = vmatprep.subr.mxu0 0.0
          %594 = vmatpush1.msra.mxu0 0.0
          %595 = vmatprep.subr.mxu0 0.0
          %596 = vmatpush1.msra.mxu0 0.0
          %597 = vmatprep.subr.mxu0 0.0
          %598 = vmatpush1.msra.mxu0 0.0
          %599 = vmatprep.subr.mxu0 0.0
          %600 = vmatpush1.msra.mxu0 0.0
          %601 = vmatprep.subr.mxu0 0.0
          %602 = vmatpush1.msra.mxu0 0.0
          %603 = vmatprep.subr.mxu0 0.0
          %604 = vmatpush1.msra.mxu0 0.0
          %605 = vmatprep.subr.mxu0 0.0
          %606 = vmatpush1.msra.mxu0 0.0
          %607 = vmatprep.subr.mxu0 0.0
          %608 = vmatpush1.msra.mxu0 0.0
          %609 = vmatprep.subr.mxu0 0.0
          %610 = vmatpush1.msra.mxu0 0.0
          %611 = vmatprep.subr.mxu0 0.0
          %612 = vmatpush1.msra.mxu0 0.0
          %613 = vmatprep.subr.mxu0 0.0
          %614 = vmatpush1.msra.mxu0 0.0
          %615 = vmatprep.subr.mxu0 0.0
          %616 = vmatpush1.msra.mxu0 0.0
          %617 = vmatprep.subr.mxu0 0.0
          %618 = vmatpush1.msra.mxu0 0.0
          %619 = vmatprep.subr.mxu0 0.0
          %620 = vmatpush1.msra.mxu0 0.0
          %621 = vmatprep.subr.mxu0 0.0
          %622 = vmatpush1.msra.mxu0 0.0
          %623 = vmatprep.subr.mxu0 0.0
          %624 = vmatpush1.msra.mxu0 0.0
          %625 = vmatprep.subr.mxu0 0.0
          %626 = vmatpush1.msra.mxu0 0.0
          %627 = vmatprep.subr.mxu0 0.0
          %628 = vmatpush1.msra.mxu0 0.0
          %629 = vmatprep.subr.mxu0 0.0
          %630 = vmatpush1.msra.mxu0 0.0
          %631 = vmatprep.subr.mxu0 0.0
          %632 = vmatpush1.msra.mxu0 0.0
          %633 = vmatprep.subr.mxu0 0.0
          %634 = vmatpush1.msra.mxu0 0.0
          %635 = vmatprep.subr.mxu0 0.0
          %636 = vmatpush1.msra.mxu0 0.0
          %637 = vmatprep.subr.mxu0 0.0
          %638 = vmatpush1.msra.mxu0 0.0
          %639 = vmatprep.subr.mxu0 0.0
          %640 = vmatpush1.msra.mxu0 0.0
          %641 = vmatprep.subr.mxu0 0.0
          %642 = vmatpush1.msra.mxu0 0.0
          %643 = vmatprep.subr.mxu0 0.0
          %644 = vmatpush1.msra.mxu0 0.0
          %645 = vmatprep.mubr.f32.mxu0 0.0
          %646 = vmatmul.mubr.f32.gmra.mrb[0].mxu0 %v579
          %v647 = vpop.f32.mrb[0].mxu0
          %v648 = vadd.f32 0.0, %v647
          %v649 = vpop.f32.mrb[0].mxu0
          %650 = vdwg.mxu0
          %v652 = vsel %vm577, %v572, 0
          %654 = vmatprep.subr.mxu0 0.0
          %655 = vmatpush1.msra.mxu0 %v573
          %656 = vmatprep.subr.mxu0 0.0
          %657 = vmatpush1.msra.mxu0 %v574
          %658 = vmatprep.subr.mxu0 0.0
          %659 = vmatpush1.msra.mxu0 %v575
          %660 = vmatprep.subr.mxu0 0.0
          %661 = vmatpush1.msra.mxu0 %v576
          %662 = vmatprep.subr.mxu0 0.0
          %663 = vmatpush1.msra.mxu0 0.0
          %664 = vmatprep.subr.mxu0 0.0
          %665 = vmatpush1.msra.mxu0 0.0
          %666 = vmatprep.subr.mxu0 0.0
          %667 = vmatpush1.msra.mxu0 0.0
          %668 = vmatprep.subr.mxu0 0.0
          %669 = vmatpush1.msra.mxu0 0.0
          %670 = vmatprep.subr.mxu0 0.0
          %671 = vmatpush1.msra.mxu0 0.0
          %672 = vmatprep.subr.mxu0 0.0
          %673 = vmatpush1.msra.mxu0 0.0
          %674 = vmatprep.subr.mxu0 0.0
          %675 = vmatpush1.msra.mxu0 0.0
          %676 = vmatprep.subr.mxu0 0.0
          %677 = vmatpush1.msra.mxu0 0.0
          %678 = vmatprep.subr.mxu0 0.0
          %679 = vmatpush1.msra.mxu0 0.0
          %680 = vmatprep.subr.mxu0 0.0
          %681 = vmatpush1.msra.mxu0 0.0
          %682 = vmatprep.subr.mxu0 0.0
          %683 = vmatpush1.msra.mxu0 0.0
          %684 = vmatprep.subr.mxu0 0.0
          %685 = vmatpush1.msra.mxu0 0.0
          %686 = vmatprep.subr.mxu0 0.0
          %687 = vmatpush1.msra.mxu0 0.0
          %688 = vmatprep.subr.mxu0 0.0
          %689 = vmatpush1.msra.mxu0 0.0
          %690 = vmatprep.subr.mxu0 0.0
          %691 = vmatpush1.msra.mxu0 0.0
          %692 = vmatprep.subr.mxu0 0.0
          %693 = vmatpush1.msra.mxu0 0.0
          %694 = vmatprep.subr.mxu0 0.0
          %695 = vmatpush1.msra.mxu0 0.0
          %696 = vmatprep.subr.mxu0 0.0
          %697 = vmatpush1.msra.mxu0 0.0
          %698 = vmatprep.subr.mxu0 0.0
          %699 = vmatpush1.msra.mxu0 0.0
          %700 = vmatprep.subr.mxu0 0.0
          %701 = vmatpush1.msra.mxu0 0.0
          %702 = vmatprep.subr.mxu0 0.0
          %703 = vmatpush1.msra.mxu0 0.0
          %704 = vmatprep.subr.mxu0 0.0
          %705 = vmatpush1.msra.mxu0 0.0
          %706 = vmatprep.subr.mxu0 0.0
          %707 = vmatpush1.msra.mxu0 0.0
          %708 = vmatprep.subr.mxu0 0.0
          %709 = vmatpush1.msra.mxu0 0.0
          %710 = vmatprep.subr.mxu0 0.0
          %711 = vmatpush1.msra.mxu0 0.0
          %712 = vmatprep.subr.mxu0 0.0
          %713 = vmatpush1.msra.mxu0 0.0
          %714 = vmatprep.subr.mxu0 0.0
          %715 = vmatpush1.msra.mxu0 0.0
          %716 = vmatprep.subr.mxu0 0.0
          %717 = vmatpush1.msra.mxu0 0.0
          %718 = vmatprep.mubr.f32.mxu0 0.0
          %719 = vmatmul.mubr.f32.gmra.mrb[0].mxu0 %v652
          %v720 = vpop.f32.mrb[0].mxu0
          %v721 = vadd.f32 0.0, %v720
          %v722 = vpop.f32.mrb[0].mxu0
          %723 = vdwg.mxu0
          %v724 = vld [vmem:[#allocation10] sm:$0x1]
          %v725 = vmul.f32 %v721, %v724
          %726 = vst [vmem:[%s342] sm:$0x1] %v725
          %v727 = vld [vmem:[#allocation12] sm:$0x1]
          %v728 = vmul.f32 %v648, %v725
          %v729 = vsub.f32 %v727, %v728
          %730 = vst [vmem:[%s348] sm:$0x1] %v729
        $region68: #{tpu_custom_call.1} parent=39 // pred_fallthru
          _
        %s731 = sand.u32 %s161, 1
        %s732 = scalar_lea.sflag [#allocation6], %s731
        %s733 = sand.u32 %s161, 1
        %s734 = scalar_lea.vmem [#allocation13], %s733
        %s735 = sand.u32 %s187, 1
        %s736 = scalar_lea.sflag [#allocation15], %s735
        %s737 = sand.u32 %s187, 1
        %s738 = scalar_lea.vmem [#allocation14], %s737
        // Predicated region
        $region69: #{tpu_custom_call.1} parent=39 // pred_check
          %p739 = pneg %p171
        $region70: #{tpu_custom_call.1} parent=39 // pred_check_branch
          %741 = sbr.rel (%p739) target = $region72
        $region71: #{tpu_custom_call.1} parent=39 // pred_region
          %s743 = ssub.s32 16, 16
          %744 = vsyncadd %s732, %s743
          %s745 = smul.addr %s33, 16
          %s746 = scalar_lea.hbm %s5, %s745
          %s748 = sshll.u32 %s734, 4
          %s749 = int_to_ptr.vmem [resolvable:$true] %s748
          %751 = dma.vmem_to_hbm [thread:$0]  %s749, 16, %s746, %s732
        $region72: #{tpu_custom_call.1} parent=39 // pred_fallthru
          _
        // Predicated region
        $region73: #{tpu_custom_call.1} parent=39 // pred_check
          %p752 = pneg %p197
        $region74: #{tpu_custom_call.1} parent=39 // pred_check_branch
          %754 = sbr.rel (%p752) target = $region76
        $region75: #{tpu_custom_call.1} parent=39 // pred_region
          %s756 = ssub.s32 16, 16
          %757 = vsyncadd %s736, %s756
          %s758 = smul.addr %s33, 16
          %s759 = scalar_lea.hbm %s6, %s758
          %s761 = sshll.u32 %s738, 4
          %s762 = int_to_ptr.vmem [resolvable:$true] %s761
          %764 = dma.vmem_to_hbm [thread:$0]  %s762, 16, %s759, %s736
        $region76: #{tpu_custom_call.1} parent=39 // pred_fallthru
          _
      $region40: #{tpu_custom_call.1} parent=5 // pred_fallthru
        _
      %p765 = scmp.le.s32.totalorder 2, %s24
      // Predicated region
      $region77: #{tpu_custom_call.1} parent=5 // pred_check
        %p766 = pneg %p765
      $region78: #{tpu_custom_call.1} parent=5 // pred_check_branch
        %768 = sbr.rel (%p766) target = $region80
      $region79: #{tpu_custom_call.1} parent=5 // pred_region
        %s769 = ssub.s32 %s24, 2
        // Predicated region
        $region81: #{tpu_custom_call.1} parent=79 // pred_check
          %p770 = pneg %p177
        $region82: #{tpu_custom_call.1} parent=79 // pred_check_branch
          %772 = sbr.rel (%p770) target = $region84
        $region83: #{tpu_custom_call.1} parent=79 // pred_region
          %s773 = sand.u32 %s162, 1
          %s774 = scalar_lea.sflag [#allocation6], %s773
          %s775 = sand.u32 %s162, 1
          %s776 = scalar_lea.vmem [#allocation13], %s775
          %777 = dma.done %s774, 16
        $region84: #{tpu_custom_call.1} parent=79 // pred_fallthru
          _
        // Predicated region
        $region85: #{tpu_custom_call.1} parent=79 // pred_check
          %p778 = pneg %p203
        $region86: #{tpu_custom_call.1} parent=79 // pred_check_branch
          %780 = sbr.rel (%p778) target = $region88
        $region87: #{tpu_custom_call.1} parent=79 // pred_region
          %s781 = sand.u32 %s188, 1
          %s782 = scalar_lea.sflag [#allocation15], %s781
          %s783 = sand.u32 %s188, 1
          %s784 = scalar_lea.vmem [#allocation14], %s783
          %785 = dma.done %s782, 16
        $region88: #{tpu_custom_call.1} parent=79 // pred_fallthru
          _
      $region80: #{tpu_custom_call.1} parent=5 // pred_fallthru
        _
    $region6: #{tpu_custom_call.1} parent=1 // loop_footer
      %s28 = sadd.s32 1, %s24
    $region7: #{tpu_custom_call.1} parent=1 // loop_footer_branch
      %23 = sbr.rel target = $region3
    $region8: #{tpu_custom_call.1} parent=1 // loop_exit
      _
    %786 = vsyncpa [#allocation5], 1
    %s787 = scalar_lea.sflag [#allocation5], 1
    %788 = vsyncpa %s787, 1
    %789 = vsyncpa [#allocation8], 1
    %790 = vsyncpa [#allocation11], 1
    %791 = vsyncpa [#allocation6], 1
    %s792 = scalar_lea.sflag [#allocation6], 1
    %793 = vsyncpa %s792, 1
    %794 = vsyncpa [#allocation15], 1
    %s795 = scalar_lea.sflag [#allocation15], 1
    %796 = vsyncpa %s795, 1

</llo_original>
